<compile_context>
chip_gen: v7x
topology: tpu7x:2x2x1
jax: 0.10.0
libtpu: 0.0.40
codegen_flags: <defaults>
</compile_context>

<pallas_src>
import functools

import numpy as np
import jax
import jax.numpy as jnp
from jax import lax
from jax.experimental import pallas as pl
from jax.experimental.pallas import tpu as pltpu


def _round_up(x, m):
    return ((x + m - 1) // m) * m


def _vmem_capacity_bytes():
    """Generation-aware VMEM capacity (v5e/v6e: 128 MiB, v7x: 64 MiB)."""
    try:
        return int(pltpu.get_tpu_info().vmem_capacity_bytes)
    except Exception:
        return 64 * 1024 * 1024


def _vmem_bytes(tile, s_pad, d1):
    """Over-approximate per-step VMEM footprint of the worse pass, including in-kernel
    temporaries (iota, one-hot, matmul result) and 128-lane padding of narrow arrays."""
    del d1  # narrow lane dims are conservatively padded to 128 below
    lane = 128
    p1 = (2 * 8 * tile * 4            # seg (1, tile) i32, sublane-padded, x2 buffers
          + 2 * tile * lane * 2       # values (tile, D+1) bf16, lane-padded, x2 buffers
          + 2 * s_pad * lane * 4      # resident accumulator / out block f32
          + s_pad * tile * (4 + 2)    # iota i32 + one-hot bf16 temporaries
          + s_pad * lane * 4)         # matmul result temp
    p2 = (2 * tile * lane * 4         # seg column (tile, 1) i32, lane-padded, x2 buffers
          + 2 * s_pad * lane * 4      # pooled input, x2 buffers
          + 2 * tile * lane * 4       # out (tile, D) f32, lane-padded, x2 buffers
          + tile * s_pad * (4 + 2)    # iota i32 + one-hot bf16 temporaries
          + tile * lane * 4)          # matmul result temp
    return max(p1, p2)


def _choose_tile(nnz, s_pad, d1, budget):
    tile = 8192                       # large tiles cut per-step overhead + accumulator RMW
    while tile > 128 and _vmem_bytes(tile, s_pad, d1) > budget:
        tile //= 2
    return min(tile, _round_up(nnz, 128))


def _segment_mean_kernel(seg_ref, val_ref, acc_ref, *, count_col, eps):
    """Accumulate per-segment sums (+ counts in column `count_col`), then divide."""
    c = pl.program_id(0)              # segment-block (core) index
    i = pl.program_id(1)              # nnz-tile index (reduction axis)

    @pl.when(i == 0)
    def _init():
        acc_ref[...] = jnp.zeros_like(acc_ref)

    seg = seg_ref[...]                                    # (1, T) int32, padded slots = -1
    s_blk = acc_ref.shape[0]
    tile = seg.shape[1]
    # One-hot built directly segment-major (S_blk, T) -> no transpose; rows offset by this
    # core's slice of the segment axis. Counts ride along as the values' ones column, so a
    # single MXU matmul yields sums AND counts (note: MXU N-width is only D+1 here, so do
    # not expect peak MXU TF/s on v6e/v7x).
    row = lax.broadcasted_iota(jnp.int32, (s_blk, tile), 0) + c * s_blk
    onehot = (row == seg).astype(jnp.bfloat16)            # exact 0/1 in bf16
    acc_ref[...] += jnp.dot(onehot, val_ref[...],
                            preferred_element_type=jnp.float32)

    @pl.when(i == pl.num_programs(1) - 1)
    def _finalize():
        acc = acc_ref[...]
        counts = acc[:, count_col:count_col + 1]          # (S_blk, 1)
        inv = pl.reciprocal(counts + eps, approx=True)    # EUP slot, off the VPU
        acc_ref[...] = acc * inv


def _gather_kernel(seg_ref, pooled_ref, out_ref, *, d):
    """Map pooled (S, D+1) rows back onto each nonzero of this tile."""
    seg = seg_ref[...]                                    # (T, 1) int32
    tile = seg.shape[0]
    s_pad = pooled_ref.shape[0]
    # One-hot built directly nonzero-major (T, S) -> plain NN matmul, no transpose.
    col = lax.broadcasted_iota(jnp.int32, (tile, s_pad), 1)
    onehot = (col == seg).astype(jnp.bfloat16)            # (T, S) bf16
    pooled = pooled_ref[...].astype(jnp.bfloat16)         # (S, D+1) bf16
    out = jnp.dot(onehot, pooled, preferred_element_type=jnp.float32)  # (T, D+1)
    out_ref[...] = out[:, :d].astype(out_ref.dtype)       # drop the counts column


def pool_forward(indices, values, dense_shape, axis=0, eps=1e-16):
    """Pallas equivalent of Pool.forward.

    indices     : (2, nnz) int32 COO indices of an (R, C) sparse matrix
    values      : (nnz, D) float values (dense trailing dim D)
    dense_shape : (R, C)
    axis        : pooled-over axis (0 -> per-column mean, 1 -> per-row mean)

    Returns (nnz, D) float32: for each nonzero, the mean over all nonzeros sharing its
    index along (1 - axis), i.e. torch.index_select(output / n[:, None], 0, index[1-axis]).
    """
    nnz, d = values.shape
    num_segments = int(dense_shape[1 - axis])
    d1 = d + 1                                    # column d carries the fused counts

    s_pad = _round_up(max(num_segments, 8), 8)
    # Megacore split of pass 1 across the segment axis (2 blocks). Neutral on 1-TC chips.
    n_cores = 2 if (s_pad >= 16 and s_pad % 16 == 0) else 1
    s_blk = s_pad // n_cores

    vmem_cap = _vmem_capacity_bytes()
    budget = min(int(vmem_cap * 0.65), 96 * 1024 * 1024)
    tile = _choose_tile(nnz, s_pad, d1, budget)
    nnz_pad = _round_up(nnz, tile)
    n_tiles = nnz_pad // tile

    # Always set an explicit scoped-VMEM limit sized from the footprint (with margin for
    # spills), clamped to the chip's capacity; v5e's 16 MiB default is otherwise too small.
    fp = _vmem_bytes(tile, s_pad, d1)
    vmem_limit = int(min(max(int(1.5 * fp) + (1 << 20), 16 << 20), int(vmem_cap * 0.9)))

    # Lane-major + column-major copies of the segment ids; padded slots get -1 so they
    # match no segment row (tiny arrays).
    seg = indices[1 - axis].astype(jnp.int32)
    seg_row = jnp.full((1, nnz_pad), -1, jnp.int32).at[0, :nnz].set(seg)
    seg_col = seg_row.reshape(nnz_pad, 1)

    # Values keep their native trailing dim (no 128-lane padding): only the ones column is
    # appended and rows are padded to a tile multiple so every DMA stays in-bounds.
    vals1 = jnp.zeros((nnz_pad, d1), jnp.bfloat16)
    vals1 = vals1.at[:nnz, :d].set(values.astype(jnp.bfloat16))
    vals1 = vals1.at[:nnz, d].set(1.0)

    # ---- pass 1: tiled segment sums/counts -> pooled means, (s_pad, D+1) f32 ----
    pooled = pl.pallas_call(
        functools.partial(_segment_mean_kernel, count_col=d, eps=eps),
        out_shape=jax.ShapeDtypeStruct((s_pad, d1), jnp.float32),
        grid=(n_cores, n_tiles),
        in_specs=[
            pl.BlockSpec((1, tile), lambda c, i: (0, i)),
            pl.BlockSpec((tile, d1), lambda c, i: (i, 0)),
        ],
        out_specs=pl.BlockSpec((s_blk, d1), lambda c, i: (c, 0)),
        compiler_params=pltpu.CompilerParams(
            dimension_semantics=("parallel", "arbitrary"),
            vmem_limit_bytes=vmem_limit),
        cost_estimate=pl.CostEstimate(
            flops=2 * nnz_pad * s_pad * d1,
            transcendentals=s_pad,
            bytes_accessed=nnz_pad * 4 + nnz_pad * d1 * 2 + s_pad * d1 * 4),
    )(seg_row, vals1)

    # ---- pass 2: gather pooled rows back onto every nonzero, native-width writeback ----
    out_pad = pl.pallas_call(
        functools.partial(_gather_kernel, d=d),
        out_shape=jax.ShapeDtypeStruct((nnz_pad, d), jnp.float32),
        grid=(n_tiles,),
        in_specs=[
            pl.BlockSpec((tile, 1), lambda i: (i, 0)),
            pl.BlockSpec((s_pad, d1), lambda i: (0, 0)),
        ],
        out_specs=pl.BlockSpec((tile, d), lambda i: (i, 0)),
        compiler_params=pltpu.CompilerParams(
            dimension_semantics=("parallel",),
            vmem_limit_bytes=vmem_limit),
        cost_estimate=pl.CostEstimate(
            flops=2 * nnz_pad * s_pad * d1,
            transcendentals=0,
            bytes_accessed=nnz_pad * 4 + s_pad * d1 * 4 + nnz_pad * d * 4),
    )(seg_col, pooled)

    if nnz_pad != nnz:
        return out_pad[:nnz]
    return out_pad


def _reference(indices, values, dense_shape, axis=0, eps=1e-16):
    """Pure-JAX f32 reference mirroring the PyTorch sparse ops."""
    seg = indices[1 - axis]
    num_segments = int(dense_shape[1 - axis])
    sums = jax.ops.segment_sum(values, seg, num_segments=num_segments)
    counts = jax.ops.segment_sum(jnp.ones((values.shape[0],), jnp.float32),
                                 seg, num_segments=num_segments)
    pooled = sums / (counts[:, None] + eps)
    return pooled[seg]


if __name__ == "__main__":
    key = jax.random.PRNGKey(0)
    R, C, D = 8, 16, 8          # sparse matrix (R, C), dense value dim D
    nnz = 32
    axis = 0                    # pool across rows -> per-column mean (Pool(axis=0))

    k_pos, k_val = jax.random.split(key)
    # Deterministic, duplicate-free nonzero positions.
    flat_pos = jax.random.choice(k_pos, R * C, shape=(nnz,), replace=False)
    rows = (flat_pos // C).astype(jnp.int32)
    cols = (flat_pos % C).astype(jnp.int32)
    indices = jnp.stack([rows, cols], axis=0)                 # (2, nnz)
    values = jax.random.normal(k_val, (nnz, D), jnp.float32)  # (nnz, D)

    out = pool_forward(indices, values, (R, C), axis=axis)
    out = jax.block_until_ready(out)

    ref = _reference(indices, values, (R, C), axis=axis)
    assert out.shape == (nnz, D)
    # bf16 MXU feed + approx reciprocal => relaxed tolerance vs the f32 reference.
    assert np.allclose(np.asarray(out), np.asarray(ref), rtol=5e-2, atol=5e-2)
    print("KERNEL_OK")
</pallas_src>

<mosaic_0001>
module attributes {stable_mosaic.version = 11 : i64} {
  func.func @_segment_mean_kernel(%arg0: i32, %arg1: i32, %arg2: memref<1x128xi32, #tpu.memory_space<vmem>>, %arg3: memref<128x9xbf16, #tpu.memory_space<vmem>>, %arg4: memref<8x9xf32, #tpu.memory_space<vmem>>) attributes {dimension_semantics = [#tpu.dimension_semantics<parallel>, #tpu.dimension_semantics<arbitrary>], iteration_bounds = array<i64: 2, 1>, scalar_prefetch = 0 : i64, scratch_operands = 0 : i64, tpu.core_type = #tpu.core_type<tc>, window_params = [{transform_indices = @transform_0, window_bounds = array<i64: 1, 128>}, {transform_indices = @transform_1, window_bounds = array<i64: 128, 9>}, {transform_indices = @transform_2, window_bounds = array<i64: 8, 9>}]} {
    %c0_i32 = arith.constant 0 : i32
    %0 = arith.cmpi eq, %arg1, %c0_i32 : i32
    %1 = arith.extui %0 : i1 to i32
    %c0_i32_0 = arith.constant 0 : i32
    %2 = arith.cmpi ne, %1, %c0_i32_0 : i32
    scf.if %2 {
      %cst_10 = arith.constant 0.000000e+00 : f32
      %21 = vector.broadcast %cst_10 : f32 to vector<8x9xf32>
      %c0_11 = arith.constant 0 : index
      %c0_12 = arith.constant 0 : index
      %22 = vector.load %arg4[%c0_11, %c0_12] : memref<8x9xf32, #tpu.memory_space<vmem>>, vector<8x9xf32>
      tpu.vector_store %arg4[%c0_11, %c0_12], %21 {strides = array<i32>} : memref<8x9xf32, #tpu.memory_space<vmem>>, vector<8x9xf32>,
    } else {
    }
    %c0 = arith.constant 0 : index
    %c0_1 = arith.constant 0 : index
    %3 = vector.load %arg2[%c0, %c0_1] : memref<1x128xi32, #tpu.memory_space<vmem>>, vector<1x128xi32>
    %4 = tpu.iota {dimensions = array<i32: 0>} : vector<8x128xi32>
    %c8_i32 = arith.constant 8 : i32
    %5 = arith.muli %arg0, %c8_i32 : i32
    %6 = vector.broadcast %5 : i32 to vector<8x128xi32>
    %7 = arith.addi %4, %6 : vector<8x128xi32>
    %8 = vector.broadcast %3 : vector<1x128xi32> to vector<8x128xi32>
    %9 = arith.cmpi eq, %7, %8 : vector<8x128xi32>
    %10 = arith.extui %9 : vector<8x128xi1> to vector<8x128xi32>
    %11 = arith.sitofp %10 : vector<8x128xi32> to vector<8x128xf32>
    %12 = arith.truncf %11 : vector<8x128xf32> to vector<8x128xbf16>
    %c0_2 = arith.constant 0 : index
    %c0_3 = arith.constant 0 : index
    %13 = vector.load %arg4[%c0_2, %c0_3] : memref<8x9xf32, #tpu.memory_space<vmem>>, vector<8x9xf32>
    %c0_4 = arith.constant 0 : index
    %c0_5 = arith.constant 0 : index
    %14 = vector.load %arg3[%c0_4, %c0_5] : memref<128x9xbf16, #tpu.memory_space<vmem>>, vector<128x9xbf16>
    %cst = arith.constant dense<0.000000e+00> : vector<8x9xf32>
    %15 = tpu.matmul %12, %14, %cst {dimension_numbers = #tpu.dot_dimension_numbers<[1], [0], [0], [1], [0, 0, 1, 1], [], []>} : vector<8x128xbf16>, vector<128x9xbf16>, vector<8x9xf32> -> vector<8x9xf32>
    %16 = arith.addf %13, %15 : vector<8x9xf32>
    %c0_6 = arith.constant 0 : index
    %c0_7 = arith.constant 0 : index
    %17 = vector.load %arg4[%c0_6, %c0_7] : memref<8x9xf32, #tpu.memory_space<vmem>>, vector<8x9xf32>
    tpu.vector_store %arg4[%c0_6, %c0_7], %16 {strides = array<i32>} : memref<8x9xf32, #tpu.memory_space<vmem>>, vector<8x9xf32>,
    %c0_i32_8 = arith.constant 0 : i32
    %18 = arith.cmpi eq, %arg1, %c0_i32_8 : i32
    %19 = arith.extui %18 : i1 to i32
    %c0_i32_9 = arith.constant 0 : i32
    %20 = arith.cmpi ne, %19, %c0_i32_9 : i32
    scf.if %20 {
      %c0_10 = arith.constant 0 : index
      %c0_11 = arith.constant 0 : index
      %21 = vector.load %arg4[%c0_10, %c0_11] : memref<8x9xf32, #tpu.memory_space<vmem>>, vector<8x9xf32>
      %22 = vector.extract_strided_slice %21 {offsets = [0, 8], sizes = [8, 1], strides = [1, 1]} : vector<8x9xf32> to vector<8x1xf32>
      %cst_12 = arith.constant 1.000000e-16 : f32
      %23 = vector.broadcast %cst_12 : f32 to vector<8x1xf32>
      %24 = arith.addf %22, %23 : vector<8x1xf32>
      %25 = tpu.reciprocal %24 {approx = true} : vector<8x1xf32> -> vector<8x1xf32>
      %26 = vector.broadcast %25 : vector<8x1xf32> to vector<8x9xf32>
      %27 = arith.mulf %21, %26 : vector<8x9xf32>
      %c0_13 = arith.constant 0 : index
      %c0_14 = arith.constant 0 : index
      %28 = vector.load %arg4[%c0_13, %c0_14] : memref<8x9xf32, #tpu.memory_space<vmem>>, vector<8x9xf32>
      tpu.vector_store %arg4[%c0_13, %c0_14], %27 {strides = array<i32>} : memref<8x9xf32, #tpu.memory_space<vmem>>, vector<8x9xf32>,
    } else {
    }
    return
  }
  func.func @transform_0(%arg0: i32, %arg1: i32) -> (i32, i32) {
    %c0_i32 = arith.constant 0 : i32
    %c0_i32_0 = arith.constant 0 : i32
    return %c0_i32, %arg1 : i32, i32
  }
  func.func @transform_1(%arg0: i32, %arg1: i32) -> (i32, i32) {
    %c0_i32 = arith.constant 0 : i32
    %c0_i32_0 = arith.constant 0 : i32
    return %arg1, %c0_i32 : i32, i32
  }
  func.func @transform_2(%arg0: i32, %arg1: i32) -> (i32, i32) {
    %c0_i32 = arith.constant 0 : i32
    %c0_i32_0 = arith.constant 0 : i32
    return %arg0, %c0_i32 : i32, i32
  }
}

</mosaic_0001>

<llo_original>
// kernel: tpu_custom_call.1
$region0: #{tpu_custom_call.1}
  #allocation0 [shape = 'u32[]', space=smem, size = 0x4, offset = 0x4, fixed_abs, tag = 'smem constant byte address 0x4 - core index']
  #allocation1 [shape = 'u32[144,128]{1,0:T(1,128)}', space=vmem, size = 0x12000, scoped, tag = 'internal scratch']
  %s0 = inlined_call_operand.vmem [shape: s32[1,128], index: 0, kind: input, shape index: {}]
  %s1 = inlined_call_operand.vmem [shape: bf16[128,9], index: 1, kind: input, shape index: {}]
  %s2 = inlined_call_operand.hbm [shape: f32[16,9], index: 2, kind: output, shape index: {}]
  %s3 = sld [smem:[#allocation0]]
  $region49: #{tpu_custom_call.1} parent=0
    _
  %s5 = ssub.s32 1, %s3
  %s6 = scalar_select 0, %s5, %s3
  $region1: #{tpu_custom_call.1} parent=0
    #allocation2 [shape = 'u8[8192]{0}', space=vmem, size = 0x2000, scoped, tag = 'output window, operand 0']
    #allocation3 [shape = 's32[2]{0}', space=sflag, size = 0x8, scoped, tag = 'scoped memory for tpu_custom_call.1']
    %7 = vsyncpa [#allocation3], 0
    %s8 = scalar_lea.sflag [#allocation3], 1
    %9 = vsyncpa %s8, 0
    loop: start=0, step=1, limit=4
    $region2: #{tpu_custom_call.1} parent=1 // loop_pre_header
      _
    $region3: #{tpu_custom_call.1} parent=1 // loop_header
      %s11 = sphi 0, %s15
      %p12 = scmp.ge.s32.totalorder %s11, 4
      %s18 = sphi 0, %s30
      %s19 = sphi 0, %s26
      %s20 = sphi 0, %s18
      %s21 = sphi 0, %s19
      %s22 = sphi 0, %s20
      %s23 = sphi 0, %s21
      %s33 = sphi 0, %s35
      %s36 = sphi 0, %s33
      %s37 = sphi 0, %s36
      %s53 = sphi 0, %s37
      %s59 = sphi 0, %s61
      %s62 = sphi 0, %s59
      %s63 = sphi 0, %s62
      %s79 = sphi 0, %s63
      %s85 = sphi 0, %s87
      %s88 = sphi 0, %s85
      %s89 = sphi 0, %s88
      %s105 = sphi 0, %s89
    $region4: #{tpu_custom_call.1} parent=1 // loop_header_branch
      %14 = sbr.rel (%p12) target = $region8
    $region5: #{tpu_custom_call.1} parent=1 // loop_body
      %s16 = ssub.s32 %s11, 1
      %s17 = ssub.s32 %s11, 2
      %s24 = sadd.s32 1, %s19
      %p25 = scmp.ge.s32.totalorder %s24, 1
      %s26 = scalar_select %p25, 0, %s24
      %s27 = sadd.s32 1, %s18
      %s28 = scalar_select %p25, %s27, %s18
      %p29 = scmp.ge.s32.totalorder %s28, 2
      %s30 = scalar_select %p29, 0, %s28
      %s31 = ssub.s32 %s19, %s26
      %p32 = scmp.eq.s32.totalorder %s31, 0
      %s34 = sadd.s32 %s33, 1
      %s35 = scalar_select %p32, %s33, %s34
      %p38 = pneg %p32
      %p39 = scmp.eq.s32.totalorder %s11, 1
      %p40 = por %p38, %p39
      %p41 = scmp.ne.s32.totalorder %s33, %s36
      %p42 = scmp.eq.s32.totalorder %s11, 0
      %p43 = por %p41, %p42
      %p44 = scmp.ne.s32.totalorder %s33, %s36
      %p45 = scmp.eq.s32.totalorder %s16, 1
      %p46 = por %p44, %p45
      %p47 = scmp.ne.s32.totalorder %s36, %s37
      %p48 = scmp.eq.s32.totalorder %s16, 0
      %p49 = por %p47, %p48
      %p50 = scmp.ne.s32.totalorder %s36, %s37
      %p51 = scmp.eq.s32.totalorder %s17, 1
      %p52 = por %p50, %p51
      %p54 = scmp.ne.s32.totalorder %s37, %s53
      %p55 = scmp.eq.s32.totalorder %s17, 0
      %p56 = por %p54, %p55
      %s57 = ssub.s32 %s19, %s26
      %p58 = scmp.eq.s32.totalorder %s57, 0
      %s60 = sadd.s32 %s59, 1
      %s61 = scalar_select %p58, %s59, %s60
      %p64 = pneg %p58
      %p65 = scmp.eq.s32.totalorder %s11, 1
      %p66 = por %p64, %p65
      %p67 = scmp.ne.s32.totalorder %s59, %s62
      %p68 = scmp.eq.s32.totalorder %s11, 0
      %p69 = por %p67, %p68
      %p70 = scmp.ne.s32.totalorder %s59, %s62
      %p71 = scmp.eq.s32.totalorder %s16, 1
      %p72 = por %p70, %p71
      %p73 = scmp.ne.s32.totalorder %s62, %s63
      %p74 = scmp.eq.s32.totalorder %s16, 0
      %p75 = por %p73, %p74
      %p76 = scmp.ne.s32.totalorder %s62, %s63
      %p77 = scmp.eq.s32.totalorder %s17, 1
      %p78 = por %p76, %p77
      %p80 = scmp.ne.s32.totalorder %s63, %s79
      %p81 = scmp.eq.s32.totalorder %s17, 0
      %p82 = por %p80, %p81
      %s83 = ssub.s32 %s18, %s30
      %p84 = scmp.eq.s32.totalorder %s83, 0
      %s86 = sadd.s32 %s85, 1
      %s87 = scalar_select %p84, %s85, %s86
      %p90 = pneg %p84
      %p91 = scmp.eq.s32.totalorder %s11, 1
      %p92 = por %p90, %p91
      %p93 = scmp.ne.s32.totalorder %s85, %s88
      %p94 = scmp.eq.s32.totalorder %s11, 0
      %p95 = por %p93, %p94
      %p96 = scmp.ne.s32.totalorder %s85, %s88
      %p97 = scmp.eq.s32.totalorder %s16, 1
      %p98 = por %p96, %p97
      %p99 = scmp.ne.s32.totalorder %s88, %s89
      %p100 = scmp.eq.s32.totalorder %s16, 0
      %p101 = por %p99, %p100
      %p102 = scmp.ne.s32.totalorder %s88, %s89
      %p103 = scmp.eq.s32.totalorder %s17, 1
      %p104 = por %p102, %p103
      %p106 = scmp.ne.s32.totalorder %s89, %s105
      %p107 = scmp.eq.s32.totalorder %s17, 0
      %p108 = por %p106, %p107
      %p109 = scmp.le.s32.totalorder 1, %s11
      %p110 = scmp.lt.s32.totalorder %s11, 3
      %p111 = pnand %p109, %p110
      %p112 = pneg %p111
      // Predicated region
      $region9: #{tpu_custom_call.1} parent=5 // pred_check
        _
      $region10: #{tpu_custom_call.1} parent=5 // pred_check_branch
        %114 = sbr.rel (%p111) target = $region12
      $region11: #{tpu_custom_call.1} parent=5 // pred_region
        %s115 = ssub.s32 %s11, 1
        // Predicated region
        $region13: #{tpu_custom_call.1} parent=11 // pred_check
          %p116 = pneg %p49
        $region14: #{tpu_custom_call.1} parent=11 // pred_check_branch
          %118 = sbr.rel (%p116) target = $region16
        $region15: #{tpu_custom_call.1} parent=11 // pred_region
          %p119 = scmp.lt.s32.totalorder %s21, 0
          %s120 = scalar_select %p119, %s21, 0
          %s121 = scalar_lea.vmem %s0, %s120
        $region16: #{tpu_custom_call.1} parent=11 // pred_fallthru
          _
        // Predicated region
        $region17: #{tpu_custom_call.1} parent=11 // pred_check
          %p122 = pneg %p75
        $region18: #{tpu_custom_call.1} parent=11 // pred_check_branch
          %124 = sbr.rel (%p122) target = $region20
        $region19: #{tpu_custom_call.1} parent=11 // pred_region
          %s125 = smul.u32 16, %s21
          %p126 = scmp.lt.s32.totalorder %s125, 15
          %s127 = scalar_select %p126, %s125, 15
          %s128 = smul.addr %s127, 4
          %s129 = scalar_lea.vmem %s1, %s128
          %s130 = smul.u32 16, %s21
        $region20: #{tpu_custom_call.1} parent=11 // pred_fallthru
          _
      $region12: #{tpu_custom_call.1} parent=5 // pred_fallthru
        _
      %p131 = scmp.lt.s32.totalorder %s11, 2
      // Predicated region
      $region21: #{tpu_custom_call.1} parent=5 // pred_check
        %p132 = pneg %p131
      $region22: #{tpu_custom_call.1} parent=5 // pred_check_branch
        %134 = sbr.rel (%p132) target = $region24
      $region23: #{tpu_custom_call.1} parent=5 // pred_region
        _
      $region24: #{tpu_custom_call.1} parent=5 // pred_fallthru
        _
      %p135 = scmp.le.s32.totalorder 1, %s11
      %p136 = scmp.lt.s32.totalorder %s11, 3
      %p137 = pnand %p135, %p136
      %p138 = pneg %p137
      // Predicated region
      $region25: #{tpu_custom_call.1} parent=5 // pred_check
        _
      $region26: #{tpu_custom_call.1} parent=5 // pred_check_branch
        %140 = sbr.rel (%p137) target = $region28
      $region27: #{tpu_custom_call.1} parent=5 // pred_region
        %s141 = ssub.s32 %s11, 1
        %p142 = scmp.lt.s32.totalorder %s21, 0
        %s143 = scalar_select %p142, %s21, 0
        %s144 = scalar_lea.vmem %s0, %s143
        %p145 = pneg %p49
        %p146 = pneg %p46
        %s147 = smul.u32 16, %s21
        %p148 = scmp.lt.s32.totalorder %s147, 15
        %s149 = scalar_select %p148, %s147, 15
        %s150 = smul.addr %s149, 4
        %s151 = scalar_lea.vmem %s1, %s150
        %p152 = pneg %p75
        %p153 = pneg %p72
        %p154 = pneg %p101
        %p155 = pneg %p98
        %s156 = sand.u32 %s88, 1
        %s157 = scalar_lea.sflag [#allocation3], %s156
        %s158 = sand.u32 %s88, 1
        %s159 = smul.addr %s158, 8
        %s160 = scalar_lea.vmem [#allocation2], %s159
        %p161 = scmp.lt.s32.totalorder %s21, 0
        %s162 = scalar_select %p161, %s21, 0
        %s163 = scalar_lea.vmem %s0, %s162
        %s164 = smul.u32 16, %s21
        %p165 = scmp.lt.s32.totalorder %s164, 15
        %s166 = scalar_select %p165, %s164, 15
        %s167 = smul.addr %s166, 4
        %s168 = scalar_lea.vmem %s1, %s167
        %s169 = smul.u32 16, %s21
        %p171 = scmp.eq.s32.totalorder %s21, 0
        // Predicated region
        $region29: #{tpu_custom_call.1} parent=27 // pred_check
          %p172 = pneg %p171
        $region30: #{tpu_custom_call.1} parent=27 // pred_check_branch
          %174 = sbr.rel (%p172) target = $region32
        $region31: #{tpu_custom_call.1} parent=27 // pred_region
          %vm175 = vcmask 72704
          %176 = vst.msk [vmem:[%s160] sm:$0xff] %vm175, 0.0
        $region32: #{tpu_custom_call.1} parent=27 // pred_fallthru
          _
        %v177 = vld [vmem:[%s163] sm:$0x1]
        %v178 = vlaneseq
        %v179 = vshrl.u32 %v178, 7
        %s180 = smul.u32 %s20, 8
        %v181 = vstv %s180
        %v182 = vadd.s32 %v179, %v181
        %v183 = vlaneseq
        %v184 = vshrl.u32 %v183, 7
        %v185 = vsub.s32 0, %v184
        %v186 = vrot.slane %v177, %v185
        %vm187 = vcmp.eq.s32.totalorder %v182, %v186
        %v188 = vsel %vm187, 1, 0
        %v189 = vcvt.s32.f32 %v188
        %v190 = vpack.c.bf16 %v189, %v189
        %v191 = vld [vmem:[%s160] sm:$0xff]
        %v192 = vld [vmem:[%s168] sm:$0xf]
        %v193 = vld [vmem:[%s168 + $0x4] sm:$0xf]
        %v194 = vld [vmem:[%s168 + $0x8] sm:$0xf]
        %v195 = vld [vmem:[%s168 + $0xc] sm:$0xf]
        %v196 = vld [vmem:[%s168 + $0x10] sm:$0xf]
        %v197 = vld [vmem:[%s168 + $0x14] sm:$0xf]
        %v198 = vld [vmem:[%s168 + $0x18] sm:$0xf]
        %v199 = vld [vmem:[%s168 + $0x1c] sm:$0xf]
        %v200 = vld [vmem:[%s168 + $0x20] sm:$0xf]
        %v201 = vld [vmem:[%s168 + $0x24] sm:$0xf]
        %v202 = vld [vmem:[%s168 + $0x28] sm:$0xf]
        %v203 = vld [vmem:[%s168 + $0x2c] sm:$0xf]
        %v204 = vld [vmem:[%s168 + $0x30] sm:$0xf]
        %v205 = vld [vmem:[%s168 + $0x34] sm:$0xf]
        %v206 = vld [vmem:[%s168 + $0x38] sm:$0xf]
        %v207 = vld [vmem:[%s168 + $0x3c] sm:$0xf]
        %v224 = vunpack.c.l.b16 %v192
        %v225 = vunpack.c.l.b16 %v193
        %v226 = vunpack.c.l.b16 %v194
        %v227 = vunpack.c.l.b16 %v195
        %v228 = vunpack.c.l.b16 %v196
        %v229 = vunpack.c.l.b16 %v197
        %v230 = vunpack.c.l.b16 %v198
        %v231 = vunpack.c.l.b16 %v199
        %v232 = vunpack.c.l.b16 %v200
        %v233 = vunpack.c.l.b16 %v201
        %v234 = vunpack.c.l.b16 %v202
        %v235 = vunpack.c.l.b16 %v203
        %v236 = vunpack.c.l.b16 %v204
        %v237 = vunpack.c.l.b16 %v205
        %v238 = vunpack.c.l.b16 %v206
        %v239 = vunpack.c.l.b16 %v207
        %v240 = vpack.c.b16 %v225, %v224
        %v241 = vpack.c.b16 %v227, %v226
        %v242 = vpack.c.b16 %v229, %v228
        %v243 = vpack.c.b16 %v231, %v230
        %v244 = vpack.c.b16 %v233, %v232
        %v245 = vpack.c.b16 %v235, %v234
        %v246 = vpack.c.b16 %v237, %v236
        %v247 = vpack.c.b16 %v239, %v238
        %256 = vmatprep.subr.bf16.mxu0 0
        %257 = vmatpush1.bf16.msra.mxu0 %v240
        %258 = vmatprep.subr.bf16.mxu0 0
        %259 = vmatpush1.bf16.msra.mxu0 %v241
        %260 = vmatprep.subr.bf16.mxu0 0
        %261 = vmatpush1.bf16.msra.mxu0 %v242
        %262 = vmatprep.subr.bf16.mxu0 0
        %263 = vmatpush1.bf16.msra.mxu0 %v243
        %264 = vmatprep.subr.bf16.mxu0 0
        %265 = vmatpush1.bf16.msra.mxu0 %v244
        %266 = vmatprep.subr.bf16.mxu0 0
        %267 = vmatpush1.bf16.msra.mxu0 %v245
        %268 = vmatprep.subr.bf16.mxu0 0
        %269 = vmatpush1.bf16.msra.mxu0 %v246
        %270 = vmatprep.subr.bf16.mxu0 0
        %271 = vmatpush1.bf16.msra.mxu0 %v247
        %272 = vmatprep.subr.bf16.mxu0 0
        %273 = vmatpush1.bf16.msra.mxu0 0
        %274 = vmatprep.subr.bf16.mxu0 0
        %275 = vmatpush1.bf16.msra.mxu0 0
        %276 = vmatprep.subr.bf16.mxu0 0
        %277 = vmatpush1.bf16.msra.mxu0 0
        %278 = vmatprep.subr.bf16.mxu0 0
        %279 = vmatpush1.bf16.msra.mxu0 0
        %280 = vmatprep.subr.bf16.mxu0 0
        %281 = vmatpush1.bf16.msra.mxu0 0
        %282 = vmatprep.subr.bf16.mxu0 0
        %283 = vmatpush1.bf16.msra.mxu0 0
        %284 = vmatprep.subr.bf16.mxu0 0
        %285 = vmatpush1.bf16.msra.mxu0 0
        %286 = vmatprep.subr.bf16.mxu0 0
        %287 = vmatpush1.bf16.msra.mxu0 0
        %288 = vmatprep.mubr.bf16.mxu0 0
        %289 = vmatmul.mubr.bf16.gmra.mrb[0].mxu0 %v190
        %v290 = vpop.f32.mrb[0].mxu0
        %v291 = vadd.f32 0.0, %v290
        %v292 = vpop.f32.mrb[0].mxu0
        %v293 = vpop.f32.mrb[0].mxu0
        %v294 = vpop.f32.mrb[0].mxu0
        %295 = vdwg.mxu0
        %v296 = vadd.f32 %v191, %v291
        %vm297 = vcmask 72704
        %298 = vst.msk [vmem:[%s160] sm:$0xff] %vm297, %v296
        // Predicated region
        $region33: #{tpu_custom_call.1} parent=27 // pred_check
          %p299 = pneg %p171
        $region34: #{tpu_custom_call.1} parent=27 // pred_check_branch
          %301 = sbr.rel (%p299) target = $region36
        $region35: #{tpu_custom_call.1} parent=27 // pred_region
          %v302 = vld [vmem:[%s160] sm:$0xff]
          %v303 = vadd.f32 %v302, 1e-16
          %v304 = vrcp.pop %v303
          %306 = vset.pattern.permute.xlu0 8
          %307 = vperm.xlu0 %306, %v304
          %v308 = vpop.permute.xlu0 %307
          %v310 = vmul.f32 %v302, %v308
          %311 = vst.msk [vmem:[%s160] sm:$0xff] %vm297, %v310
        $region36: #{tpu_custom_call.1} parent=27 // pred_fallthru
          _
        %s312 = sand.u32 %s88, 1
        %s313 = scalar_lea.sflag [#allocation3], %s312
        %s314 = sand.u32 %s88, 1
        %s315 = smul.addr %s314, 8
        %s316 = scalar_lea.vmem [#allocation2], %s315
        // Predicated region
        $region37: #{tpu_custom_call.1} parent=27 // pred_check
          %p317 = pneg %p98
        $region38: #{tpu_custom_call.1} parent=27 // pred_check_branch
          %319 = sbr.rel (%p317) target = $region40
        $region39: #{tpu_custom_call.1} parent=27 // pred_region
          %s321 = ssub.s32 128, 128
          %322 = vsyncadd %s313, %s321
          %s323 = smul.addr %s20, 128
          %s324 = scalar_lea.hbm %s2, %s323
          %s326 = sshll.u32 %s316, 4
          %s327 = int_to_ptr.vmem [resolvable:$true] %s326
          %329 = dma.vmem_to_hbm [thread:$0]  %s327, 128, %s324, %s313
        $region40: #{tpu_custom_call.1} parent=27 // pred_fallthru
          _
      $region28: #{tpu_custom_call.1} parent=5 // pred_fallthru
        _
      %p330 = scmp.le.s32.totalorder 2, %s11
      // Predicated region
      $region41: #{tpu_custom_call.1} parent=5 // pred_check
        %p331 = pneg %p330
      $region42: #{tpu_custom_call.1} parent=5 // pred_check_branch
        %333 = sbr.rel (%p331) target = $region44
      $region43: #{tpu_custom_call.1} parent=5 // pred_region
        %s334 = ssub.s32 %s11, 2
        // Predicated region
        $region45: #{tpu_custom_call.1} parent=43 // pred_check
          %p335 = pneg %p104
        $region46: #{tpu_custom_call.1} parent=43 // pred_check_branch
          %337 = sbr.rel (%p335) target = $region48
        $region47: #{tpu_custom_call.1} parent=43 // pred_region
          %s338 = sand.u32 %s89, 1
          %s339 = scalar_lea.sflag [#allocation3], %s338
          %s340 = sand.u32 %s89, 1
          %s341 = smul.addr %s340, 8
          %s342 = scalar_lea.vmem [#allocation2], %s341
          %343 = dma.done %s339, 128
        $region48: #{tpu_custom_call.1} parent=43 // pred_fallthru
          _
      $region44: #{tpu_custom_call.1} parent=5 // pred_fallthru
        _
    $region6: #{tpu_custom_call.1} parent=1 // loop_footer
      %s15 = sadd.s32 1, %s11
    $region7: #{tpu_custom_call.1} parent=1 // loop_footer_branch
      %10 = sbr.rel target = $region3
    $region8: #{tpu_custom_call.1} parent=1 // loop_exit
      _
    %344 = vsyncpa [#allocation3], 1
    %s345 = scalar_lea.sflag [#allocation3], 1
    %346 = vsyncpa %s345, 1

</llo_original>
